<compile_context>
chip_gen: v7x
topology: tpu7x:2x2x1
jax: 0.10.0
libtpu: 0.0.40
codegen_flags: <defaults>
</compile_context>

<pallas_src>
import jax
import jax.numpy as jnp
from jax.experimental import pallas as pl
from jax.experimental.pallas import tpu as pltpu


def critic_kernel(state_ref, action_ref, params_ref, o_ref):
    # Static sizes derived from the refs (trace-time constants).
    S = state_ref.shape[1]
    A = action_ref.shape[1]
    H = params_ref.shape[1]
    O = o_ref.shape[1]

    # One vector load for the whole parameter slab; static register slicing.
    p = params_ref[...]                               # (S+A+H+O+3, H)
    w1_s = p[0:S, :]                                  # (S, H)
    w1_a = p[S:S + A, :]                              # (A, H)
    w2 = p[S + A:S + A + H, :]                        # (H, H)
    w3 = p[S + A + H:S + A + H + O, :]                # (O, H)  (out-major rows)
    b1 = p[S + A + H + O:S + A + H + O + 1, :]        # (1, H)
    b2 = p[S + A + H + O + 1:S + A + H + O + 2, :]    # (1, H)
    b3 = p[S + A + H + O + 2:S + A + H + O + 3, 0:O]  # (1, O)

    # Layer 1: fused concat -> x @ W1 == state @ W1[:S] + action @ W1[S:]
    h1 = (
        jnp.dot(state_ref[...], w1_s, preferred_element_type=jnp.float32)
        + jnp.dot(action_ref[...], w1_a, preferred_element_type=jnp.float32)
        + b1
    )
    h1 = jnp.maximum(h1, 0.0)

    # Layer 2
    h2 = jnp.dot(h1, w2, preferred_element_type=jnp.float32) + b2
    h2 = jnp.maximum(h2, 0.0)

    # Layer 3
    if O == 1:
        # Width-1 output: VPU multiply + row-reduce, skips a lane-sparse MXU pass.
        out = jnp.sum(h2 * w3, axis=-1, keepdims=True) + b3
    else:
        out = jnp.dot(h2, w3.T, preferred_element_type=jnp.float32) + b3

    o_ref[...] = out.astype(o_ref.dtype)


def pack_params(params, hidden_size, output_size):
    """Pack PyTorch-layout params into one (S+A+H+O+3, H) f32 slab (done once).

    params = (w1, b1, w2, b2, w3, b3) with W of shape (out, in), b of shape (out,).
    Layout (rows):
      [0, S+A)             W1^T   (in-features x H)
      [S+A, S+A+H)         W2^T
      [S+A+H, S+A+H+O)     W3     (out-major rows, used directly for the reduce)
      next 3 rows          b1, b2, b3 (b3 zero-padded to width H)
    """
    w1, b1, w2, b2, w3, b3 = params
    H, O = hidden_size, output_size
    assert O <= H, "pack_params assumes output_size <= hidden_size"
    rows = [
        w1.T.astype(jnp.float32),
        w2.T.astype(jnp.float32),
        w3.astype(jnp.float32),
        b1[None, :].astype(jnp.float32),
        b2[None, :].astype(jnp.float32),
        jnp.pad(b3.astype(jnp.float32), (0, H - O))[None, :],
    ]
    return jnp.concatenate(rows, axis=0)


def critic_forward(state, action, packed_params, output_size, *, batch_tile=512):
    """state: (B, S), action: (B, A), packed_params from pack_params().
    Returns (B, output_size) in float32."""
    state = state.astype(jnp.float32)
    action = action.astype(jnp.float32)
    B, S = state.shape
    A = action.shape[1]

    if B <= batch_tile:
        # Small batch: one full block, single grid point (block == full dims is legal).
        TB, Bp = B, B
    else:
        # Large batch: tile (multiple of 8) + zero-pad so every block is full.
        TB = batch_tile
        Bp = pl.cdiv(B, TB) * TB
        if Bp != B:
            pad = Bp - B
            state = jnp.pad(state, ((0, pad), (0, 0)))
            action = jnp.pad(action, ((0, pad), (0, 0)))

    grid = (Bp // TB,)

    out = pl.pallas_call(
        critic_kernel,
        out_shape=jax.ShapeDtypeStruct((Bp, output_size), jnp.float32),
        grid=grid,
        in_specs=[
            pl.BlockSpec((TB, S), lambda i: (i, 0)),
            pl.BlockSpec((TB, A), lambda i: (i, 0)),
            # Constant block index -> parameter slab stays resident in VMEM.
            pl.BlockSpec(packed_params.shape, lambda i: (0, 0)),
        ],
        out_specs=pl.BlockSpec((TB, output_size), lambda i: (i, 0)),
        compiler_params=pltpu.CompilerParams(dimension_semantics=("parallel",)),
    )(state, action, packed_params)

    return out if Bp == B else out[:B]


def init_params(key, input_size, hidden_size, output_size):
    """nn.Linear-style init: W ~ U(-1/sqrt(fan_in), 1/sqrt(fan_in)), shape (out, in)."""
    keys = jax.random.split(key, 6)

    def linear(kw, kb, fan_in, fan_out):
        bound = 1.0 / (fan_in ** 0.5)
        w = jax.random.uniform(kw, (fan_out, fan_in), jnp.float32, -bound, bound)
        b = jax.random.uniform(kb, (fan_out,), jnp.float32, -bound, bound)
        return w, b

    w1, b1 = linear(keys[0], keys[1], input_size, hidden_size)
    w2, b2 = linear(keys[2], keys[3], hidden_size, hidden_size)
    w3, b3 = linear(keys[4], keys[5], hidden_size, output_size)
    return (w1, b1, w2, b2, w3, b3)


def _reference(state, action, params):
    w1, b1, w2, b2, w3, b3 = params
    x = jnp.concatenate([state, action], axis=1)
    h = jnp.maximum(x @ w1.T + b1, 0.0)
    h = jnp.maximum(h @ w2.T + b2, 0.0)
    return h @ w3.T + b3


if __name__ == "__main__":
    # Shapes consistent with the module: state_dim + action_dim == input_size.
    batch = 2
    state_dim = 12
    action_dim = 4
    input_size = state_dim + action_dim
    hidden_size = 32
    output_size = 1

    key = jax.random.PRNGKey(0)
    k_state, k_action, k_params = jax.random.split(key, 3)

    state = jax.random.normal(k_state, (batch, state_dim), jnp.float32)
    action = jax.random.normal(k_action, (batch, action_dim), jnp.float32)
    params = init_params(k_params, input_size, hidden_size, output_size)
    packed = pack_params(params, hidden_size, output_size)   # one-time packing

    # Primary small-shape run.
    out = critic_forward(state, action, packed, output_size)
    out = jax.block_until_ready(out)
    ref = _reference(state, action, params)
    assert out.shape == (batch, output_size)
    assert jnp.allclose(out, ref, atol=1e-5, rtol=1e-5)

    # Sanity check of the batched / tiled (parallel-grid) path.
    big_b = 1040  # forces padding to 3 tiles of 512
    ks, ka = jax.random.split(jax.random.PRNGKey(1))
    big_state = jax.random.normal(ks, (big_b, state_dim), jnp.float32)
    big_action = jax.random.normal(ka, (big_b, action_dim), jnp.float32)
    big_out = jax.block_until_ready(
        critic_forward(big_state, big_action, packed, output_size)
    )
    big_ref = _reference(big_state, big_action, params)
    assert big_out.shape == (big_b, output_size)
    assert jnp.allclose(big_out, big_ref, atol=1e-5, rtol=1e-5)

    print("KERNEL_OK")
</pallas_src>

<mosaic_0001>
module attributes {stable_mosaic.version = 11 : i64} {
  func.func @critic_kernel(%arg0: i32, %arg1: memref<2x12xf32, #tpu.memory_space<vmem>>, %arg2: memref<2x4xf32, #tpu.memory_space<vmem>>, %arg3: memref<52x32xf32, #tpu.memory_space<vmem>>, %arg4: memref<2x1xf32, #tpu.memory_space<vmem>>) attributes {dimension_semantics = [#tpu.dimension_semantics<parallel>], iteration_bounds = array<i64: 1>, scalar_prefetch = 0 : i64, scratch_operands = 0 : i64, tpu.core_type = #tpu.core_type<tc>, window_params = [{transform_indices = @transform_0, window_bounds = array<i64: 2, 12>}, {transform_indices = @transform_1, window_bounds = array<i64: 2, 4>}, {pipeline_mode = #tpu.pipeline_mode<synchronous>, transform_indices = @transform_2, window_bounds = array<i64: 52, 32>}, {transform_indices = @transform_3, window_bounds = array<i64: 2, 1>}]} {
    %c0 = arith.constant 0 : index
    %c0_0 = arith.constant 0 : index
    %0 = vector.load %arg3[%c0, %c0_0] : memref<52x32xf32, #tpu.memory_space<vmem>>, vector<52x32xf32>
    %1 = vector.extract_strided_slice %0 {offsets = [0, 0], sizes = [12, 32], strides = [1, 1]} : vector<52x32xf32> to vector<12x32xf32>
    %2 = vector.extract_strided_slice %0 {offsets = [12, 0], sizes = [4, 32], strides = [1, 1]} : vector<52x32xf32> to vector<4x32xf32>
    %3 = vector.extract_strided_slice %0 {offsets = [16, 0], sizes = [32, 32], strides = [1, 1]} : vector<52x32xf32> to vector<32x32xf32>
    %4 = vector.extract_strided_slice %0 {offsets = [48, 0], sizes = [1, 32], strides = [1, 1]} : vector<52x32xf32> to vector<1x32xf32>
    %5 = vector.extract_strided_slice %0 {offsets = [49, 0], sizes = [1, 32], strides = [1, 1]} : vector<52x32xf32> to vector<1x32xf32>
    %6 = vector.extract_strided_slice %0 {offsets = [50, 0], sizes = [1, 32], strides = [1, 1]} : vector<52x32xf32> to vector<1x32xf32>
    %7 = vector.extract_strided_slice %0 {offsets = [51, 0], sizes = [1, 1], strides = [1, 1]} : vector<52x32xf32> to vector<1x1xf32>
    %c0_1 = arith.constant 0 : index
    %c0_2 = arith.constant 0 : index
    %8 = vector.load %arg1[%c0_1, %c0_2] : memref<2x12xf32, #tpu.memory_space<vmem>>, vector<2x12xf32>
    %cst = arith.constant dense<0.000000e+00> : vector<2x32xf32>
    %9 = tpu.matmul %8, %1, %cst {dimension_numbers = #tpu.dot_dimension_numbers<[1], [0], [0], [1], [0, 0, 1, 1], [], []>} : vector<2x12xf32>, vector<12x32xf32>, vector<2x32xf32> -> vector<2x32xf32>
    %c0_3 = arith.constant 0 : index
    %c0_4 = arith.constant 0 : index
    %10 = vector.load %arg2[%c0_3, %c0_4] : memref<2x4xf32, #tpu.memory_space<vmem>>, vector<2x4xf32>
    %cst_5 = arith.constant dense<0.000000e+00> : vector<2x32xf32>
    %11 = tpu.matmul %10, %2, %cst_5 {dimension_numbers = #tpu.dot_dimension_numbers<[1], [0], [0], [1], [0, 0, 1, 1], [], []>} : vector<2x4xf32>, vector<4x32xf32>, vector<2x32xf32> -> vector<2x32xf32>
    %12 = arith.addf %9, %11 : vector<2x32xf32>
    %13 = vector.broadcast %5 : vector<1x32xf32> to vector<2x32xf32>
    %14 = arith.addf %12, %13 : vector<2x32xf32>
    %cst_6 = arith.constant 0.000000e+00 : f32
    %15 = vector.broadcast %cst_6 : f32 to vector<2x32xf32>
    %16 = arith.maximumf %14, %15 : vector<2x32xf32>
    %cst_7 = arith.constant dense<0.000000e+00> : vector<2x32xf32>
    %17 = tpu.matmul %16, %3, %cst_7 {dimension_numbers = #tpu.dot_dimension_numbers<[1], [0], [0], [1], [0, 0, 1, 1], [], []>} : vector<2x32xf32>, vector<32x32xf32>, vector<2x32xf32> -> vector<2x32xf32>
    %18 = vector.broadcast %6 : vector<1x32xf32> to vector<2x32xf32>
    %19 = arith.addf %17, %18 : vector<2x32xf32>
    %cst_8 = arith.constant 0.000000e+00 : f32
    %20 = vector.broadcast %cst_8 : f32 to vector<2x32xf32>
    %21 = arith.maximumf %19, %20 : vector<2x32xf32>
    %22 = vector.broadcast %4 : vector<1x32xf32> to vector<2x32xf32>
    %23 = arith.mulf %21, %22 : vector<2x32xf32>
    %cst_9 = arith.constant dense<0.000000e+00> : vector<2xf32>
    %24 = vector.multi_reduction <add>, %23, %cst_9 [1] : vector<2x32xf32> to vector<2xf32>
    %25 = vector.shape_cast %24 : vector<2xf32> to vector<2x1xf32>
    %26 = vector.broadcast %7 : vector<1x1xf32> to vector<2x1xf32>
    %27 = arith.addf %25, %26 : vector<2x1xf32>
    %c0_10 = arith.constant 0 : index
    %c0_11 = arith.constant 0 : index
    %28 = vector.load %arg4[%c0_10, %c0_11] : memref<2x1xf32, #tpu.memory_space<vmem>>, vector<2x1xf32>
    tpu.vector_store %arg4[%c0_10, %c0_11], %27 {strides = array<i32>} : memref<2x1xf32, #tpu.memory_space<vmem>>, vector<2x1xf32>,
    return
  }
  func.func @transform_0(%arg0: i32) -> (i32, i32) {
    %c0_i32 = arith.constant 0 : i32
    %c0_i32_0 = arith.constant 0 : i32
    return %arg0, %c0_i32 : i32, i32
  }
  func.func @transform_1(%arg0: i32) -> (i32, i32) {
    %c0_i32 = arith.constant 0 : i32
    %c0_i32_0 = arith.constant 0 : i32
    return %arg0, %c0_i32 : i32, i32
  }
  func.func @transform_2(%arg0: i32) -> (i32, i32) {
    %c0_i32 = arith.constant 0 : i32
    %c0_i32_0 = arith.constant 0 : i32
    %c0_i32_1 = arith.constant 0 : i32
    return %c0_i32, %c0_i32_0 : i32, i32
  }
  func.func @transform_3(%arg0: i32) -> (i32, i32) {
    %c0_i32 = arith.constant 0 : i32
    %c0_i32_0 = arith.constant 0 : i32
    return %arg0, %c0_i32 : i32, i32
  }
}

</mosaic_0001>

<llo_original>
// kernel: tpu_custom_call.1
$region0: #{tpu_custom_call.1}
  #allocation0 [shape = 'u32[]', space=smem, size = 0x4, offset = 0x4, fixed_abs, tag = 'smem constant byte address 0x4 - core index']
  #allocation1 [shape = 'u32[144,128]{1,0:T(1,128)}', space=vmem, size = 0x12000, scoped, tag = 'internal scratch']
  %s0 = inlined_call_operand.vmem [shape: f32[2,12], index: 0, kind: input, shape index: {}]
  %s1 = inlined_call_operand.vmem [shape: f32[2,4], index: 1, kind: input, shape index: {}]
  %s2 = inlined_call_operand.vmem [shape: f32[52,32], index: 2, kind: input, shape index: {}]
  %s3 = inlined_call_operand.vmem [shape: f32[2,1], index: 3, kind: output, shape index: {}]
  %s4 = sld [smem:[#allocation0]]
  $region22: #{tpu_custom_call.1} parent=0
    _
  %s6 = ssub.s32 1, %s4
  %s7 = scalar_select 0, %s6, %s4
  // Predicated region
  $region2: #{tpu_custom_call.1} parent=0 // pred_check
    _
  $region3: #{tpu_custom_call.1} parent=0 // pred_check_branch
    %9 = sbr.rel (0) target = $region5
  $region4: #{tpu_custom_call.1} parent=0 // pred_region
    _
  $region5: #{tpu_custom_call.1} parent=0 // pred_fallthru
    _
  // Predicated region
  $region6: #{tpu_custom_call.1} parent=0 // pred_check
    _
  $region7: #{tpu_custom_call.1} parent=0 // pred_check_branch
    %11 = sbr.rel (0) target = $region9
  $region8: #{tpu_custom_call.1} parent=0 // pred_region
    _
  $region9: #{tpu_custom_call.1} parent=0 // pred_fallthru
    _
  // Predicated region
  $region10: #{tpu_custom_call.1} parent=0 // pred_check
    _
  $region11: #{tpu_custom_call.1} parent=0 // pred_check_branch
    %13 = sbr.rel (0) target = $region13
  $region12: #{tpu_custom_call.1} parent=0 // pred_region
    _
  $region13: #{tpu_custom_call.1} parent=0 // pred_fallthru
    _
  %v14 = vld [vmem:[%s2] sm:$0xff]
  %v15 = vld [vmem:[%s2 + $0x8] sm:$0xff]
  %v16 = vld [vmem:[%s2 + $0x10] sm:$0xff]
  %v17 = vld [vmem:[%s2 + $0x18] sm:$0xff]
  %v18 = vld [vmem:[%s2 + $0x20] sm:$0xff]
  %v19 = vld [vmem:[%s2 + $0x28] sm:$0xff]
  %v20 = vld [vmem:[%s2 + $0x30] sm:$0xf]
  %v21 = vld [vmem:[%s0] sm:$0x3]
  %v22 = vld [vmem:[%s1] sm:$0x3]
  %v24 = vrot.slane %v15, 4
  %vm25 = vcmask 31744
  %v27 = vsel %vm25, %v22, 0
  %vm29 = vcmask 1043456
  %v30 = vsel %vm29, %v24, 0
  %32 = vmatprep.subr.mxu0 0.0
  %33 = vmatpush1.msra.mxu0 %v30
  %34 = vmatprep.subr.mxu0 0.0
  %35 = vmatpush1.msra.mxu0 0.0
  %36 = vmatprep.subr.mxu0 0.0
  %37 = vmatpush1.msra.mxu0 0.0
  %38 = vmatprep.subr.mxu0 0.0
  %39 = vmatpush1.msra.mxu0 0.0
  %40 = vmatprep.subr.mxu0 0.0
  %41 = vmatpush1.msra.mxu0 0.0
  %42 = vmatprep.subr.mxu0 0.0
  %43 = vmatpush1.msra.mxu0 0.0
  %44 = vmatprep.subr.mxu0 0.0
  %45 = vmatpush1.msra.mxu0 0.0
  %46 = vmatprep.subr.mxu0 0.0
  %47 = vmatpush1.msra.mxu0 0.0
  %48 = vmatprep.subr.mxu0 0.0
  %49 = vmatpush1.msra.mxu0 0.0
  %50 = vmatprep.subr.mxu0 0.0
  %51 = vmatpush1.msra.mxu0 0.0
  %52 = vmatprep.subr.mxu0 0.0
  %53 = vmatpush1.msra.mxu0 0.0
  %54 = vmatprep.subr.mxu0 0.0
  %55 = vmatpush1.msra.mxu0 0.0
  %56 = vmatprep.subr.mxu0 0.0
  %57 = vmatpush1.msra.mxu0 0.0
  %58 = vmatprep.subr.mxu0 0.0
  %59 = vmatpush1.msra.mxu0 0.0
  %60 = vmatprep.subr.mxu0 0.0
  %61 = vmatpush1.msra.mxu0 0.0
  %62 = vmatprep.subr.mxu0 0.0
  %63 = vmatpush1.msra.mxu0 0.0
  %64 = vmatprep.subr.mxu0 0.0
  %65 = vmatpush1.msra.mxu0 0.0
  %66 = vmatprep.subr.mxu0 0.0
  %67 = vmatpush1.msra.mxu0 0.0
  %68 = vmatprep.subr.mxu0 0.0
  %69 = vmatpush1.msra.mxu0 0.0
  %70 = vmatprep.subr.mxu0 0.0
  %71 = vmatpush1.msra.mxu0 0.0
  %72 = vmatprep.subr.mxu0 0.0
  %73 = vmatpush1.msra.mxu0 0.0
  %74 = vmatprep.subr.mxu0 0.0
  %75 = vmatpush1.msra.mxu0 0.0
  %76 = vmatprep.subr.mxu0 0.0
  %77 = vmatpush1.msra.mxu0 0.0
  %78 = vmatprep.subr.mxu0 0.0
  %79 = vmatpush1.msra.mxu0 0.0
  %80 = vmatprep.subr.mxu0 0.0
  %81 = vmatpush1.msra.mxu0 0.0
  %82 = vmatprep.subr.mxu0 0.0
  %83 = vmatpush1.msra.mxu0 0.0
  %84 = vmatprep.subr.mxu0 0.0
  %85 = vmatpush1.msra.mxu0 0.0
  %86 = vmatprep.subr.mxu0 0.0
  %87 = vmatpush1.msra.mxu0 0.0
  %88 = vmatprep.subr.mxu0 0.0
  %89 = vmatpush1.msra.mxu0 0.0
  %90 = vmatprep.subr.mxu0 0.0
  %91 = vmatpush1.msra.mxu0 0.0
  %92 = vmatprep.subr.mxu0 0.0
  %93 = vmatpush1.msra.mxu0 0.0
  %94 = vmatprep.subr.mxu0 0.0
  %95 = vmatpush1.msra.mxu0 0.0
  %96 = vmatprep.mubr.f32.mxu0 0.0
  %97 = vmatmul.mubr.f32.gmra.mrb[0].mxu0 %v27
  %v98 = vpop.f32.mrb[0].mxu0
  %v99 = vadd.f32 0.0, %v98
  %v100 = vpop.f32.mrb[0].mxu0
  %101 = vdwg.mxu0
  %vm102 = vcmask 97280
  %v104 = vsel %vm102, %v21, 0
  %v106 = vsel %vm29, %v15, 0
  %108 = vmatprep.subr.mxu0 0.0
  %109 = vmatpush1.msra.mxu0 %v14
  %110 = vmatprep.subr.mxu0 0.0
  %111 = vmatpush1.msra.mxu0 %v106
  %112 = vmatprep.subr.mxu0 0.0
  %113 = vmatpush1.msra.mxu0 0.0
  %114 = vmatprep.subr.mxu0 0.0
  %115 = vmatpush1.msra.mxu0 0.0
  %116 = vmatprep.subr.mxu0 0.0
  %117 = vmatpush1.msra.mxu0 0.0
  %118 = vmatprep.subr.mxu0 0.0
  %119 = vmatpush1.msra.mxu0 0.0
  %120 = vmatprep.subr.mxu0 0.0
  %121 = vmatpush1.msra.mxu0 0.0
  %122 = vmatprep.subr.mxu0 0.0
  %123 = vmatpush1.msra.mxu0 0.0
  %124 = vmatprep.subr.mxu0 0.0
  %125 = vmatpush1.msra.mxu0 0.0
  %126 = vmatprep.subr.mxu0 0.0
  %127 = vmatpush1.msra.mxu0 0.0
  %128 = vmatprep.subr.mxu0 0.0
  %129 = vmatpush1.msra.mxu0 0.0
  %130 = vmatprep.subr.mxu0 0.0
  %131 = vmatpush1.msra.mxu0 0.0
  %132 = vmatprep.subr.mxu0 0.0
  %133 = vmatpush1.msra.mxu0 0.0
  %134 = vmatprep.subr.mxu0 0.0
  %135 = vmatpush1.msra.mxu0 0.0
  %136 = vmatprep.subr.mxu0 0.0
  %137 = vmatpush1.msra.mxu0 0.0
  %138 = vmatprep.subr.mxu0 0.0
  %139 = vmatpush1.msra.mxu0 0.0
  %140 = vmatprep.subr.mxu0 0.0
  %141 = vmatpush1.msra.mxu0 0.0
  %142 = vmatprep.subr.mxu0 0.0
  %143 = vmatpush1.msra.mxu0 0.0
  %144 = vmatprep.subr.mxu0 0.0
  %145 = vmatpush1.msra.mxu0 0.0
  %146 = vmatprep.subr.mxu0 0.0
  %147 = vmatpush1.msra.mxu0 0.0
  %148 = vmatprep.subr.mxu0 0.0
  %149 = vmatpush1.msra.mxu0 0.0
  %150 = vmatprep.subr.mxu0 0.0
  %151 = vmatpush1.msra.mxu0 0.0
  %152 = vmatprep.subr.mxu0 0.0
  %153 = vmatpush1.msra.mxu0 0.0
  %154 = vmatprep.subr.mxu0 0.0
  %155 = vmatpush1.msra.mxu0 0.0
  %156 = vmatprep.subr.mxu0 0.0
  %157 = vmatpush1.msra.mxu0 0.0
  %158 = vmatprep.subr.mxu0 0.0
  %159 = vmatpush1.msra.mxu0 0.0
  %160 = vmatprep.subr.mxu0 0.0
  %161 = vmatpush1.msra.mxu0 0.0
  %162 = vmatprep.subr.mxu0 0.0
  %163 = vmatpush1.msra.mxu0 0.0
  %164 = vmatprep.subr.mxu0 0.0
  %165 = vmatpush1.msra.mxu0 0.0
  %166 = vmatprep.subr.mxu0 0.0
  %167 = vmatpush1.msra.mxu0 0.0
  %168 = vmatprep.subr.mxu0 0.0
  %169 = vmatpush1.msra.mxu0 0.0
  %170 = vmatprep.subr.mxu0 0.0
  %171 = vmatpush1.msra.mxu0 0.0
  %172 = vmatprep.mubr.f32.mxu0 0.0
  %173 = vmatmul.mubr.f32.gmra.mrb[0].mxu0 %v104
  %v174 = vpop.f32.mrb[0].mxu0
  %v175 = vadd.f32 %v99, %v174
  %v176 = vpop.f32.mrb[0].mxu0
  %177 = vdwg.mxu0
  %v178 = vlaneseq
  %v179 = vshrl.u32 %v178, 7
  %v180 = vsub.s32 1, %v179
  %v181 = vrot.slane %v20, %v180
  %v182 = vadd.f32 %v175, %v181
  %v183 = vmax.f32 %v182, 0.0
  %v184 = vlaneseq
  %v185 = vshrl.u32 %v184, 7
  %v186 = vsub.s32 2, %v185
  %v187 = vrot.slane %v20, %v186
  %vm188 = vcmask 261120
  %v190 = vsel %vm188, %v183, 0
  %192 = vmatprep.subr.mxu0 0.0
  %193 = vmatpush1.msra.mxu0 %v16
  %194 = vmatprep.subr.mxu0 0.0
  %195 = vmatpush1.msra.mxu0 %v17
  %196 = vmatprep.subr.mxu0 0.0
  %197 = vmatpush1.msra.mxu0 %v18
  %198 = vmatprep.subr.mxu0 0.0
  %199 = vmatpush1.msra.mxu0 %v19
  %200 = vmatprep.subr.mxu0 0.0
  %201 = vmatpush1.msra.mxu0 0.0
  %202 = vmatprep.subr.mxu0 0.0
  %203 = vmatpush1.msra.mxu0 0.0
  %204 = vmatprep.subr.mxu0 0.0
  %205 = vmatpush1.msra.mxu0 0.0
  %206 = vmatprep.subr.mxu0 0.0
  %207 = vmatpush1.msra.mxu0 0.0
  %208 = vmatprep.subr.mxu0 0.0
  %209 = vmatpush1.msra.mxu0 0.0
  %210 = vmatprep.subr.mxu0 0.0
  %211 = vmatpush1.msra.mxu0 0.0
  %212 = vmatprep.subr.mxu0 0.0
  %213 = vmatpush1.msra.mxu0 0.0
  %214 = vmatprep.subr.mxu0 0.0
  %215 = vmatpush1.msra.mxu0 0.0
  %216 = vmatprep.subr.mxu0 0.0
  %217 = vmatpush1.msra.mxu0 0.0
  %218 = vmatprep.subr.mxu0 0.0
  %219 = vmatpush1.msra.mxu0 0.0
  %220 = vmatprep.subr.mxu0 0.0
  %221 = vmatpush1.msra.mxu0 0.0
  %222 = vmatprep.subr.mxu0 0.0
  %223 = vmatpush1.msra.mxu0 0.0
  %224 = vmatprep.subr.mxu0 0.0
  %225 = vmatpush1.msra.mxu0 0.0
  %226 = vmatprep.subr.mxu0 0.0
  %227 = vmatpush1.msra.mxu0 0.0
  %228 = vmatprep.subr.mxu0 0.0
  %229 = vmatpush1.msra.mxu0 0.0
  %230 = vmatprep.subr.mxu0 0.0
  %231 = vmatpush1.msra.mxu0 0.0
  %232 = vmatprep.subr.mxu0 0.0
  %233 = vmatpush1.msra.mxu0 0.0
  %234 = vmatprep.subr.mxu0 0.0
  %235 = vmatpush1.msra.mxu0 0.0
  %236 = vmatprep.subr.mxu0 0.0
  %237 = vmatpush1.msra.mxu0 0.0
  %238 = vmatprep.subr.mxu0 0.0
  %239 = vmatpush1.msra.mxu0 0.0
  %240 = vmatprep.subr.mxu0 0.0
  %241 = vmatpush1.msra.mxu0 0.0
  %242 = vmatprep.subr.mxu0 0.0
  %243 = vmatpush1.msra.mxu0 0.0
  %244 = vmatprep.subr.mxu0 0.0
  %245 = vmatpush1.msra.mxu0 0.0
  %246 = vmatprep.subr.mxu0 0.0
  %247 = vmatpush1.msra.mxu0 0.0
  %248 = vmatprep.subr.mxu0 0.0
  %249 = vmatpush1.msra.mxu0 0.0
  %250 = vmatprep.subr.mxu0 0.0
  %251 = vmatpush1.msra.mxu0 0.0
  %252 = vmatprep.subr.mxu0 0.0
  %253 = vmatpush1.msra.mxu0 0.0
  %254 = vmatprep.subr.mxu0 0.0
  %255 = vmatpush1.msra.mxu0 0.0
  %256 = vmatprep.mubr.f32.mxu0 0.0
  %257 = vmatmul.mubr.f32.gmra.mrb[0].mxu0 %v190
  %v258 = vpop.f32.mrb[0].mxu0
  %v259 = vadd.f32 %v187, %v258
  %v260 = vpop.f32.mrb[0].mxu0
  %261 = vdwg.mxu0
  %v262 = vmax.f32 %v259, 0.0
  %v263 = vlaneseq
  %v264 = vshrl.u32 %v263, 7
  %v265 = vsub.s32 0, %v264
  %v266 = vrot.slane %v20, %v265
  %v267 = vmul.f32 %v262, %v266
  %vm268 = vcmask 254976
  %v269 = vsel %vm268, %v267, 0.0
  %270 = vadd.xlane.f32.xlu0 %v269
  %v271 = vpop.xlane.xlu0 %270
  %v272 = vlaneseq
  %v273 = vshrl.u32 %v272, 7
  %v274 = vsub.s32 3, %v273
  %v275 = vrot.slane %v20, %v274
  %v276 = vadd.f32 %v271, %v275
  %vm277 = vcmask 1024
  %278 = vst.msk [vmem:[%s3] sm:$0x3] %vm277, %v276
  // Predicated region
  $region14: #{tpu_custom_call.1} parent=0 // pred_check
    _
  $region15: #{tpu_custom_call.1} parent=0 // pred_check_branch
    %280 = sbr.rel (0) target = $region17
  $region16: #{tpu_custom_call.1} parent=0 // pred_region
    _
  $region17: #{tpu_custom_call.1} parent=0 // pred_fallthru
    _
  // Predicated region
  $region18: #{tpu_custom_call.1} parent=0 // pred_check
    _
  $region19: #{tpu_custom_call.1} parent=0 // pred_check_branch
    %282 = sbr.rel (0) target = $region21
  $region20: #{tpu_custom_call.1} parent=0 // pred_region
    _
  $region21: #{tpu_custom_call.1} parent=0 // pred_fallthru
    _

</llo_original>
